<compile_context>
chip_gen: v7x
topology: tpu7x:2x2x1
jax: 0.10.0
libtpu: 0.0.40
codegen_flags: <defaults>
</compile_context>

<pallas_src>
import functools

import jax
import jax.numpy as jnp
from jax.experimental import pallas as pl
from jax.experimental.pallas import tpu as pltpu

_LANE = 128
_SUBLANE = 8


def _layernorm_kernel(x_ref, a_ref, b_ref, o_ref, *, eps, n):
    x = x_ref[...].astype(jnp.float32)

    # Mean over the true feature count.
    mean = jnp.sum(x, axis=-1, keepdims=True) * (1.0 / n)
    xc = x - mean

    # Two-pass (centered) variance: numerically stable vs. the E[x^2]-E[x]^2
    # form, and the extra sweep over the resident tile is free under the
    # HBM-bound DMA.  torch.std default is the unbiased estimator (N-1).
    # max(n-1, 1) guards the degenerate features==1 case (torch yields NaN there).
    var = jnp.sum(xc * xc, axis=-1, keepdims=True) * (1.0 / max(n - 1, 1))
    std = jnp.sqrt(var)

    # One reciprocal per row; the per-element work is pure multiplies on the VPU.
    inv = pl.reciprocal(std + eps, approx=False)

    a = a_ref[...]  # (1, features), already float32
    b = b_ref[...]
    o_ref[...] = (a * (xc * inv) + b).astype(o_ref.dtype)


def _vmem_budget():
    """(working-set budget bytes, vmem_limit_bytes) for this TPU generation."""
    try:
        cap = pltpu.get_tpu_info().vmem_capacity_bytes
    except Exception:  # unknown / emulated target: assume the small (v7x) VMEM
        cap = 64 << 20
    if cap >= (128 << 20):
        # v5e / v6e: 128 MiB physical.  v5e's scoped default is only 16 MiB, so
        # the explicit vmem_limit below is mandatory for these tile sizes.
        return 48 << 20, 96 << 20
    # v7x: 64 MiB physical per TensorCore -> stay well under it.
    return 32 << 20, 48 << 20


def _choose_row_tile(rows, features, itemsize, budget_bytes):
    # Per tile row: input + output pipeline buffers (double-buffered, real dtype)
    # plus ~3 block-sized f32 temporaries the compiler materializes for the
    # in-kernel elementwise chain.
    per_row = (2 * 2 * itemsize + 3 * 4) * features
    max_rows = max(_SUBLANE, budget_bytes // per_row)
    tile = max(_SUBLANE, (max_rows // _SUBLANE) * _SUBLANE)

    # Never bigger than the (sublane-rounded) row count.
    rows8 = max(_SUBLANE, pl.cdiv(rows, _SUBLANE) * _SUBLANE)
    tile = min(tile, rows8)

    # Keep >= 4 grid steps when there is enough work: each of v7x's 2 TensorCores
    # ("parallel" axis) then runs >= 2 pipelined steps so input DMA, compute and
    # writeback overlap; single-TC v5e/v6e just get a deeper pipeline.
    target_steps = 4
    if rows >= target_steps * _SUBLANE:
        per_step = pl.cdiv(pl.cdiv(rows, target_steps), _SUBLANE) * _SUBLANE
        tile = min(tile, per_step)
    return tile


def layer_norm(x, a_2, b_2, eps=1e-6):
    """Pallas LayerNorm over the last axis of x. a_2/b_2 have shape (features,)."""
    orig_shape = x.shape
    features = orig_shape[-1]
    rows = 1
    for s in orig_shape[:-1]:
        rows *= s
    x2 = x.reshape(rows, features)

    budget_bytes, vmem_limit = _vmem_budget()
    itemsize = jnp.dtype(x.dtype).itemsize
    row_tile = _choose_row_tile(rows, features, itemsize, budget_bytes)
    grid = (pl.cdiv(rows, row_tile),)

    # Pre-cast params to the compute dtype once in the wrapper (no per-step cast).
    a2 = a_2.astype(jnp.float32).reshape(1, features)
    b2 = b_2.astype(jnp.float32).reshape(1, features)

    # Note on blocks: the feature block is always the full feature dim (legal for
    # the (8,128) rule even when features % 128 != 0 — full-dim blocks are
    # exempt), so no feature padding / slicing copies are ever needed.  The row
    # grid uses cdiv; a ragged last block is padded on read and its out-of-bounds
    # rows are dropped on write by the Pallas pipeline.
    kernel = functools.partial(_layernorm_kernel, eps=eps, n=features)

    out = pl.pallas_call(
        kernel,
        out_shape=jax.ShapeDtypeStruct((rows, features), x.dtype),
        grid_spec=pltpu.PrefetchScalarGridSpec(
            num_scalar_prefetch=0,
            grid=grid,
            in_specs=[
                pl.BlockSpec((row_tile, features), lambda i: (i, 0)),
                pl.BlockSpec((1, features), lambda i: (0, 0)),
                pl.BlockSpec((1, features), lambda i: (0, 0)),
            ],
            out_specs=pl.BlockSpec((row_tile, features), lambda i: (i, 0)),
        ),
        compiler_params=pltpu.CompilerParams(
            dimension_semantics=("parallel",),
            vmem_limit_bytes=vmem_limit,
        ),
    )(x2, a2, b2)

    return out.reshape(orig_shape)


if __name__ == "__main__":
    key = jax.random.PRNGKey(0)
    batch, seq, hidden = 2, 8, 32

    x = jax.random.normal(key, (batch, seq, hidden), dtype=jnp.float32)
    # Parameter init exactly as in the PyTorch module's __init__.
    a_2 = jnp.ones((hidden,), dtype=jnp.float32)
    b_2 = jnp.zeros((hidden,), dtype=jnp.float32)
    eps = 1e-6

    out = layer_norm(x, a_2, b_2, eps=eps)
    out = jax.block_until_ready(out)

    # Reference check (pure JAX), matching torch semantics (unbiased std, std+eps).
    mean = jnp.mean(x, axis=-1, keepdims=True)
    std = jnp.sqrt(jnp.sum((x - mean) ** 2, axis=-1, keepdims=True) / (hidden - 1))
    ref = a_2 * (x - mean) / (std + eps) + b_2
    assert jnp.allclose(out, ref, atol=1e-5, rtol=1e-5), "mismatch vs reference"

    print("KERNEL_OK")
</pallas_src>

<mosaic_0001>
module attributes {stable_mosaic.version = 11 : i64} {
  func.func @_layernorm_kernel(%arg0: i32, %arg1: memref<16x32xf32, #tpu.memory_space<vmem>>, %arg2: memref<1x32xf32, #tpu.memory_space<vmem>>, %arg3: memref<1x32xf32, #tpu.memory_space<vmem>>, %arg4: memref<16x32xf32, #tpu.memory_space<vmem>>) attributes {dimension_semantics = [#tpu.dimension_semantics<parallel>], iteration_bounds = array<i64: 1>, scalar_prefetch = 0 : i64, scratch_operands = 0 : i64, tpu.core_type = #tpu.core_type<tc>, window_params = [{transform_indices = @transform_0, window_bounds = array<i64: 16, 32>}, {pipeline_mode = #tpu.pipeline_mode<synchronous>, transform_indices = @transform_1, window_bounds = array<i64: 1, 32>}, {pipeline_mode = #tpu.pipeline_mode<synchronous>, transform_indices = @transform_2, window_bounds = array<i64: 1, 32>}, {transform_indices = @transform_3, window_bounds = array<i64: 16, 32>}]} {
    %c0 = arith.constant 0 : index
    %c0_0 = arith.constant 0 : index
    %0 = vector.load %arg1[%c0, %c0_0] : memref<16x32xf32, #tpu.memory_space<vmem>>, vector<16x32xf32>
    %cst = arith.constant dense<0.000000e+00> : vector<16xf32>
    %1 = vector.multi_reduction <add>, %0, %cst [1] : vector<16x32xf32> to vector<16xf32>
    %2 = vector.shape_cast %1 : vector<16xf32> to vector<16x1xf32>
    %cst_1 = arith.constant 3.125000e-02 : f32
    %3 = vector.broadcast %cst_1 : f32 to vector<16x1xf32>
    %4 = arith.mulf %2, %3 : vector<16x1xf32>
    %5 = vector.broadcast %4 : vector<16x1xf32> to vector<16x32xf32>
    %6 = arith.subf %0, %5 : vector<16x32xf32>
    %7 = arith.mulf %6, %6 : vector<16x32xf32>
    %cst_2 = arith.constant dense<0.000000e+00> : vector<16xf32>
    %8 = vector.multi_reduction <add>, %7, %cst_2 [1] : vector<16x32xf32> to vector<16xf32>
    %9 = vector.shape_cast %8 : vector<16xf32> to vector<16x1xf32>
    %cst_3 = arith.constant 0.0322580636 : f32
    %10 = vector.broadcast %cst_3 : f32 to vector<16x1xf32>
    %11 = arith.mulf %9, %10 : vector<16x1xf32>
    %12 = math.sqrt %11 : vector<16x1xf32>
    %cst_4 = arith.constant 9.99999997E-7 : f32
    %13 = vector.broadcast %cst_4 : f32 to vector<16x1xf32>
    %14 = arith.addf %12, %13 : vector<16x1xf32>
    %15 = tpu.reciprocal %14 : vector<16x1xf32> -> vector<16x1xf32>
    %c0_5 = arith.constant 0 : index
    %c0_6 = arith.constant 0 : index
    %16 = vector.load %arg2[%c0_5, %c0_6] : memref<1x32xf32, #tpu.memory_space<vmem>>, vector<1x32xf32>
    %c0_7 = arith.constant 0 : index
    %c0_8 = arith.constant 0 : index
    %17 = vector.load %arg3[%c0_7, %c0_8] : memref<1x32xf32, #tpu.memory_space<vmem>>, vector<1x32xf32>
    %18 = vector.broadcast %15 : vector<16x1xf32> to vector<16x32xf32>
    %19 = arith.mulf %6, %18 : vector<16x32xf32>
    %20 = vector.broadcast %16 : vector<1x32xf32> to vector<16x32xf32>
    %21 = arith.mulf %20, %19 : vector<16x32xf32>
    %22 = vector.broadcast %17 : vector<1x32xf32> to vector<16x32xf32>
    %23 = arith.addf %21, %22 : vector<16x32xf32>
    %c0_9 = arith.constant 0 : index
    %c0_10 = arith.constant 0 : index
    %24 = vector.load %arg4[%c0_9, %c0_10] : memref<16x32xf32, #tpu.memory_space<vmem>>, vector<16x32xf32>
    tpu.vector_store %arg4[%c0_9, %c0_10], %23 {strides = array<i32>} : memref<16x32xf32, #tpu.memory_space<vmem>>, vector<16x32xf32>,
    return
  }
  func.func @transform_0(%arg0: i32) -> (i32, i32) {
    %c0_i32 = arith.constant 0 : i32
    %c0_i32_0 = arith.constant 0 : i32
    return %arg0, %c0_i32 : i32, i32
  }
  func.func @transform_1(%arg0: i32) -> (i32, i32) {
    %c0_i32 = arith.constant 0 : i32
    %c0_i32_0 = arith.constant 0 : i32
    %c0_i32_1 = arith.constant 0 : i32
    return %c0_i32, %c0_i32_0 : i32, i32
  }
  func.func @transform_2(%arg0: i32) -> (i32, i32) {
    %c0_i32 = arith.constant 0 : i32
    %c0_i32_0 = arith.constant 0 : i32
    %c0_i32_1 = arith.constant 0 : i32
    return %c0_i32, %c0_i32_0 : i32, i32
  }
  func.func @transform_3(%arg0: i32) -> (i32, i32) {
    %c0_i32 = arith.constant 0 : i32
    %c0_i32_0 = arith.constant 0 : i32
    return %arg0, %c0_i32 : i32, i32
  }
}

</mosaic_0001>

<llo_original>
// kernel: tpu_custom_call.1
$region0: #{tpu_custom_call.1}
  #allocation0 [shape = 'u32[]', space=smem, size = 0x4, offset = 0x4, fixed_abs, tag = 'smem constant byte address 0x4 - core index']
  #allocation1 [shape = 'u32[144,128]{1,0:T(1,128)}', space=vmem, size = 0x12000, scoped, tag = 'internal scratch']
  %s0 = inlined_call_operand.hbm [shape: f32[16,32], index: 0, kind: input, shape index: {}]
  %s1 = inlined_call_operand.vmem [shape: f32[1,32], index: 1, kind: input, shape index: {}]
  %s2 = inlined_call_operand.vmem [shape: f32[1,32], index: 2, kind: input, shape index: {}]
  %s3 = inlined_call_operand.hbm [shape: f32[16,32], index: 3, kind: output, shape index: {}]
  %s4 = sld [smem:[#allocation0]]
  $region26: #{tpu_custom_call.1} parent=0
    _
  %s6 = ssub.s32 1, %s4
  %s7 = scalar_select 0, %s6, %s4
  $region1: #{tpu_custom_call.1} parent=0
    #allocation2 [shape = 'u8[8192]{0}', space=vmem, size = 0x2000, scoped, tag = 'input window, operand 0, single buffered']
    #allocation3 [shape = 's32[1]{0}', space=sflag, size = 0x4, scoped, tag = 'scoped memory for tpu_custom_call.1']
    #allocation4 [shape = 's32[1]{0}', space=sflag, size = 0x4, scoped, tag = 'scoped memory for tpu_custom_call.1']
    #allocation5 [shape = 'u8[8192]{0}', space=vmem, size = 0x2000, scoped, tag = 'output window, operand 0, single buffered']
    %8 = vsyncpa [#allocation3], 0
    %9 = vsyncpa [#allocation4], 0
    // Predicated region
    $region2: #{tpu_custom_call.1} parent=1 // pred_check
      _
    $region3: #{tpu_custom_call.1} parent=1 // pred_check_branch
      %11 = sbr.rel (0) target = $region5
    $region4: #{tpu_custom_call.1} parent=1 // pred_region
      %s13 = ssub.s32 256, 256
      %14 = vsyncadd [#allocation3], %s13
      %s15 = sshll.u32 [#allocation2], 4
      %s16 = int_to_ptr.vmem [resolvable:$true] %s15
      %21 = dma.hbm_to_vmem [thread:$0]  %s0, 256, %s16, [#allocation3], 128, 128, 8
    $region5: #{tpu_custom_call.1} parent=1 // pred_fallthru
      _
    // Predicated region
    $region6: #{tpu_custom_call.1} parent=1 // pred_check
      _
    $region7: #{tpu_custom_call.1} parent=1 // pred_check_branch
      %23 = sbr.rel (0) target = $region9
    $region8: #{tpu_custom_call.1} parent=1 // pred_region
      _
    $region9: #{tpu_custom_call.1} parent=1 // pred_fallthru
      _
    // Predicated region
    $region10: #{tpu_custom_call.1} parent=1 // pred_check
      _
    $region11: #{tpu_custom_call.1} parent=1 // pred_check_branch
      %25 = sbr.rel (0) target = $region13
    $region12: #{tpu_custom_call.1} parent=1 // pred_region
      _
    $region13: #{tpu_custom_call.1} parent=1 // pred_fallthru
      _
    // Predicated region
    $region14: #{tpu_custom_call.1} parent=1 // pred_check
      _
    $region15: #{tpu_custom_call.1} parent=1 // pred_check_branch
      %27 = sbr.rel (0) target = $region17
    $region16: #{tpu_custom_call.1} parent=1 // pred_region
      %28 = dma.done [#allocation3], 256
    $region17: #{tpu_custom_call.1} parent=1 // pred_fallthru
      _
    %v29 = vld [vmem:[#allocation2] sm:$0xff]
    %v30 = vld [vmem:[#allocation2 + $0x8] sm:$0xff]
    %vm31 = vcmask 261120
    %v32 = vsel %vm31, %v29, 0.0
    %33 = vadd.xlane.f32.xlu0 %v32
    %v34 = vpop.xlane.xlu0 %33
    %v35 = vsel %vm31, %v30, 0.0
    %36 = vadd.xlane.f32.xlu0 %v35
    %v37 = vpop.xlane.xlu0 %36
    %v38 = vmul.f32 %v34, 0.03125
    %v39 = vmul.f32 %v37, 0.03125
    %v40 = vsub.f32 %v29, %v38
    %v41 = vsub.f32 %v30, %v39
    %v42 = vmul.f32 %v40, %v40
    %v43 = vmul.f32 %v41, %v41
    %v44 = vsel %vm31, %v42, 0.0
    %45 = vadd.xlane.f32.xlu0 %v44
    %v46 = vpop.xlane.xlu0 %45
    %v47 = vsel %vm31, %v43, 0.0
    %48 = vadd.xlane.f32.xlu0 %v47
    %v49 = vpop.xlane.xlu0 %48
    %v50 = vmul.f32 %v46, 0.032258064
    %v51 = vmul.f32 %v49, 0.032258064
    %v52 = vrsqrt.pop %v50
    %v53 = vmul.f32 %v50, %v52
    %vm54 = vcmp.eq.f32.partialorder %v50, inf
    %v55 = vsel %vm54, %v50, %v53
    %vm56 = vcmp.eq.f32.partialorder %v50, 0.0
    %v57 = vand.u32 %v50, 2147483648
    %v58 = vsel %vm56, %v57, %v55
    %v59 = vrsqrt.pop %v51
    %v60 = vmul.f32 %v51, %v59
    %vm61 = vcmp.eq.f32.partialorder %v51, inf
    %v62 = vsel %vm61, %v51, %v60
    %vm63 = vcmp.eq.f32.partialorder %v51, 0.0
    %v64 = vand.u32 %v51, 2147483648
    %v65 = vsel %vm63, %v64, %v62
    %v66 = vadd.f32 %v58, 1e-06
    %v67 = vadd.f32 %v65, 1e-06
    %v68 = vrcp.pop %v66
    %v69 = vrcp.pop %v67
    %v70 = vld [vmem:[%s1] sm:$0x1]
    %v71 = vld [vmem:[%s2] sm:$0x1]
    %v72 = vmul.f32 %v40, %v68
    %v73 = vmul.f32 %v41, %v69
    %v75 = vlaneseq
    %v76 = vshrl.u32 %v75, 7
    %v77 = vsub.s32 0, %v76
    %v78 = vrot.slane %v70, %v77
    %v80 = vmul.f32 %v78, %v72
    %v81 = vmul.f32 %v78, %v73
    %v83 = vlaneseq
    %v84 = vshrl.u32 %v83, 7
    %v85 = vsub.s32 0, %v84
    %v86 = vrot.slane %v71, %v85
    %v88 = vadd.f32 %v80, %v86
    %v89 = vadd.f32 %v81, %v86
    %90 = vst.msk [vmem:[#allocation5] sm:$0xff] %vm31, %v88
    %91 = vst.msk [vmem:[#allocation5 + $0x8] sm:$0xff] %vm31, %v89
    // Predicated region
    $region18: #{tpu_custom_call.1} parent=1 // pred_check
      _
    $region19: #{tpu_custom_call.1} parent=1 // pred_check_branch
      %93 = sbr.rel (0) target = $region21
    $region20: #{tpu_custom_call.1} parent=1 // pred_region
      %s95 = ssub.s32 256, 256
      %96 = vsyncadd [#allocation4], %s95
      %s97 = sshll.u32 [#allocation5], 4
      %s98 = int_to_ptr.vmem [resolvable:$true] %s97
      %103 = dma.vmem_to_hbm [thread:$0]  %s98, 256, %s3, [#allocation4], 128, 128, 8
    $region21: #{tpu_custom_call.1} parent=1 // pred_fallthru
      _
    // Predicated region
    $region22: #{tpu_custom_call.1} parent=1 // pred_check
      _
    $region23: #{tpu_custom_call.1} parent=1 // pred_check_branch
      %105 = sbr.rel (0) target = $region25
    $region24: #{tpu_custom_call.1} parent=1 // pred_region
      %106 = dma.done [#allocation4], 256
    $region25: #{tpu_custom_call.1} parent=1 // pred_fallthru
      _
    %107 = vsyncpa [#allocation3], 1
    %108 = vsyncpa [#allocation4], 1

</llo_original>
